<compile_context>
chip_gen: v6e
topology: v6e:2x2x1
jax: 0.10.0
libtpu: 0.0.40
codegen_flags: <defaults>
</compile_context>

<pallas_src>
import functools
import math

import jax
import jax.numpy as jnp
from jax.experimental import pallas as pl
from jax.experimental.pallas import tpu as pltpu


def _round_up(x, m):
    return ((x + m - 1) // m) * m


def edge_block_kernel(e_ref, psr_ref, w_ref, out_ref):
    # e_ref  : (tr, g*De)   packed edge features (g edges per row)
    # psr_ref: (tr, g*H)    gathered sender+receiver projections (+ all biases)
    # w_ref  : (g*De, g*H)  block-diagonal edge weight kron(I_g, we)
    acc = jnp.dot(e_ref[...], w_ref[...], preferred_element_type=jnp.float32)
    out_ref[...] = (acc + psr_ref[...].astype(jnp.float32)).astype(out_ref.dtype)


def edge_block_pallas(node_attr, edge_index, edge_attr, params, *,
                      te=4096, compute_dtype=None, out_dtype=None):
    """Returns the new edge_attr [E, H]."""
    ws, bs, wr, br, we, be = params
    E, De = edge_attr.shape
    H = ws.shape[1]
    if out_dtype is None:
        out_dtype = jnp.result_type(node_attr.dtype, edge_attr.dtype, ws.dtype)

    # ---- algorithmic hoist: per-node projections, all biases folded (plain JAX) ----
    b_total = bs + br + be                      # (1, H)
    ps_nodes = node_attr @ ws + b_total         # (N, H)
    pr_nodes = node_attr @ wr                   # (N, H)

    # ---- lane-dense grouping: pack g edges per row so (g*H) % 128 == 0 ----
    g = 128 // math.gcd(H, 128)
    if g * H > 4096:
        g = 1  # TODO(synk): pathological H (huge lcm(H,128)) keeps masked stores

    is_bf16 = (compute_dtype is not None and
               jnp.dtype(compute_dtype) == jnp.dtype(jnp.bfloat16))
    sub = 16 if is_bf16 else 8                  # sublanes per vreg for the stream dtype
    unit = g * sub                              # edge-count granularity per tile

    te_eff = min(_round_up(te, unit), _round_up(E, unit))
    # v7x: keep >= 2 grid steps so the "parallel" axis shards across both TCs.
    if _round_up(E, te_eff) // te_eff < 2 and E > 2 * unit:
        te_eff = _round_up(-(-te_eff // 2), unit)
    E_pad = _round_up(E, te_eff)
    tr = te_eff // g                            # grouped rows per tile (mult of sub)
    R = E_pad // g                              # total grouped rows
    grid = E_pad // te_eff

    # ---- pad + gather + pre-add (index plumbing, plain JAX; XLA fuses gather->add) ----
    pad = E_pad - E
    senders = jnp.pad(edge_index[0], (0, pad))
    receivers = jnp.pad(edge_index[1], (0, pad))
    edge_p = jnp.pad(edge_attr, ((0, pad), (0, 0)))
    psr = jnp.take(ps_nodes, senders, axis=0) + jnp.take(pr_nodes, receivers, axis=0)

    # free row-major reshapes into lane-dense slabs
    e2 = edge_p.reshape(R, g * De)
    psr2 = psr.reshape(R, g * H)
    w_bd = jnp.kron(jnp.eye(g, dtype=we.dtype), we)   # (g*De, g*H)

    # NOTE: the edge-feature stream keeps its natural width (g*De may be <128 /
    # unaligned -> masked vld). Zero-padding De to align it would inflate the
    # smallest HBM stream, so we skip it per the review's "only if cheap" note.

    in_dtype = compute_dtype if compute_dtype is not None else psr2.dtype
    if compute_dtype is not None:               # e.g. bf16 on v5e/v6e/v7x
        e2 = e2.astype(compute_dtype)
        psr2 = psr2.astype(compute_dtype)
        w_bd = w_bd.astype(compute_dtype)

    # ---- explicit VMEM budget: double-buffered tiles + weight, with headroom ----
    in_sz = jnp.dtype(in_dtype).itemsize
    out_sz = jnp.dtype(out_dtype).itemsize
    tile_bytes = tr * g * De * in_sz + tr * g * H * in_sz + tr * g * H * out_sz
    w_bytes = (g * De) * (g * H) * in_sz
    vmem_limit = int(min(64 * 2**20, max(32 * 2**20, 4 * (tile_bytes + w_bytes))))

    out2 = pl.pallas_call(
        edge_block_kernel,
        out_shape=jax.ShapeDtypeStruct((R, g * H), out_dtype),
        grid_spec=pltpu.PrefetchScalarGridSpec(
            num_scalar_prefetch=0,
            grid=(grid,),
            in_specs=[
                pl.BlockSpec((tr, g * De), lambda i: (i, 0)),     # packed edge_attr
                pl.BlockSpec((tr, g * H), lambda i: (i, 0)),      # sender+receiver proj
                pl.BlockSpec((g * De, g * H), lambda i: (0, 0)),  # kron(I_g, we)
            ],
            out_specs=pl.BlockSpec((tr, g * H), lambda i: (i, 0)),
        ),
        compiler_params=pltpu.CompilerParams(
            dimension_semantics=("parallel",),
            vmem_limit_bytes=vmem_limit),
    )(e2, psr2, w_bd)

    return out2.reshape(E_pad, H)[:E]


def edge_block_ref(node_attr, edge_index, edge_attr, params):
    """Pure-JAX reference mirroring the PyTorch forward."""
    ws, bs, wr, br, we, be = params
    senders_attr = node_attr[edge_index[0]]
    receivers_attr = node_attr[edge_index[1]]
    v = senders_attr @ ws + bs[0]
    v = (receivers_attr @ wr + br[0]) + v
    v = (edge_attr @ we + be[0]) + v
    return v


def init_params(key, dn, de, h, dtype=jnp.float32):
    """Deterministic Linear-layer params: y = x @ W + b (W stored as (in, out))."""
    ks = jax.random.split(key, 6)

    def lin(kw, kb, fan_in):
        bound = 1.0 / jnp.sqrt(fan_in)
        w = jax.random.uniform(kw, (fan_in, h), dtype, -bound, bound)
        b = jax.random.uniform(kb, (1, h), dtype, -bound, bound)
        return w, b

    ws, bs = lin(ks[0], ks[1], dn)
    wr, br = lin(ks[2], ks[3], dn)
    we, be = lin(ks[4], ks[5], de)
    return ws, bs, wr, br, we, be


if __name__ == "__main__":
    key = jax.random.PRNGKey(0)
    k_node, k_edge, k_idx, k_param = jax.random.split(key, 4)

    N = 32    # nodes
    E = 200   # edges (deliberately NOT a tile multiple -> exercises padding)
    Dn = 16   # node feature dim
    De = 8    # edge feature dim
    H = 32    # output (hidden) edge feature dim

    node_attr = jax.random.normal(k_node, (N, Dn), jnp.float32)
    edge_attr = jax.random.normal(k_edge, (E, De), jnp.float32)
    edge_index = jax.random.randint(k_idx, (2, E), 0, N, dtype=jnp.int32)
    params = init_params(k_param, Dn, De, H)

    ref = edge_block_ref(node_attr, edge_index, edge_attr, params)

    # 1) Production defaults (te=4096, exact f32): small E exercises the
    #    grid>=2 cap (tile gets split so both v7x TensorCores would be used).
    run_default = jax.jit(edge_block_pallas)
    out_default = jax.block_until_ready(
        run_default(node_attr, edge_index, edge_attr, params))
    assert out_default.shape == (E, H)
    assert jnp.allclose(out_default, ref, atol=1e-4, rtol=1e-4)

    # 2) Small tile (te=64) to force a multi-tile grid on the toy problem.
    run_tiled = jax.jit(functools.partial(edge_block_pallas, te=64))
    out_tiled = jax.block_until_ready(
        run_tiled(node_attr, edge_index, edge_attr, params))
    assert jnp.allclose(out_tiled, ref, atol=1e-4, rtol=1e-4)

    # 3) bf16 input streams (the recommended bandwidth lever on v5e/v6e/v7x);
    #    accumulation stays f32, so only input rounding error remains.
    run_bf16 = jax.jit(functools.partial(edge_block_pallas, te=64,
                                         compute_dtype=jnp.bfloat16))
    out_bf16 = jax.block_until_ready(
        run_bf16(node_attr, edge_index, edge_attr, params))
    assert jnp.allclose(out_bf16, ref, atol=1e-1, rtol=5e-2)

    print("KERNEL_OK")
</pallas_src>

<mosaic_0001>
module attributes {stable_mosaic.version = 11 : i64} {
  func.func @edge_block_kernel(%arg0: i32, %arg1: memref<32x32xf32, #tpu.memory_space<vmem>>, %arg2: memref<32x128xf32, #tpu.memory_space<vmem>>, %arg3: memref<32x128xf32, #tpu.memory_space<vmem>>, %arg4: memref<32x128xf32, #tpu.memory_space<vmem>>) attributes {dimension_semantics = [#tpu.dimension_semantics<parallel>], iteration_bounds = array<i64: 2>, scalar_prefetch = 0 : i64, scratch_operands = 0 : i64, tpu.core_type = #tpu.core_type<tc>, window_params = [{transform_indices = @transform_0, window_bounds = array<i64: 32, 32>}, {transform_indices = @transform_1, window_bounds = array<i64: 32, 128>}, {pipeline_mode = #tpu.pipeline_mode<synchronous>, transform_indices = @transform_2, window_bounds = array<i64: 32, 128>}, {transform_indices = @transform_3, window_bounds = array<i64: 32, 128>}]} {
    %c0 = arith.constant 0 : index
    %c0_0 = arith.constant 0 : index
    %0 = vector.load %arg1[%c0, %c0_0] : memref<32x32xf32, #tpu.memory_space<vmem>>, vector<32x32xf32>
    %c0_1 = arith.constant 0 : index
    %c0_2 = arith.constant 0 : index
    %1 = vector.load %arg3[%c0_1, %c0_2] : memref<32x128xf32, #tpu.memory_space<vmem>>, vector<32x128xf32>
    %cst = arith.constant dense<0.000000e+00> : vector<32x128xf32>
    %2 = tpu.matmul %0, %1, %cst {dimension_numbers = #tpu.dot_dimension_numbers<[1], [0], [0], [1], [0, 0, 1, 1], [], []>} : vector<32x32xf32>, vector<32x128xf32>, vector<32x128xf32> -> vector<32x128xf32>
    %c0_3 = arith.constant 0 : index
    %c0_4 = arith.constant 0 : index
    %3 = vector.load %arg2[%c0_3, %c0_4] : memref<32x128xf32, #tpu.memory_space<vmem>>, vector<32x128xf32>
    %4 = arith.addf %2, %3 : vector<32x128xf32>
    %c0_5 = arith.constant 0 : index
    %c0_6 = arith.constant 0 : index
    %5 = vector.load %arg4[%c0_5, %c0_6] : memref<32x128xf32, #tpu.memory_space<vmem>>, vector<32x128xf32>
    tpu.vector_store %arg4[%c0_5, %c0_6], %4 {strides = array<i32>} : memref<32x128xf32, #tpu.memory_space<vmem>>, vector<32x128xf32>,
    return
  }
  func.func @transform_0(%arg0: i32) -> (i32, i32) {
    %c0_i32 = arith.constant 0 : i32
    %c0_i32_0 = arith.constant 0 : i32
    return %arg0, %c0_i32 : i32, i32
  }
  func.func @transform_1(%arg0: i32) -> (i32, i32) {
    %c0_i32 = arith.constant 0 : i32
    %c0_i32_0 = arith.constant 0 : i32
    return %arg0, %c0_i32 : i32, i32
  }
  func.func @transform_2(%arg0: i32) -> (i32, i32) {
    %c0_i32 = arith.constant 0 : i32
    %c0_i32_0 = arith.constant 0 : i32
    %c0_i32_1 = arith.constant 0 : i32
    return %c0_i32, %c0_i32_0 : i32, i32
  }
  func.func @transform_3(%arg0: i32) -> (i32, i32) {
    %c0_i32 = arith.constant 0 : i32
    %c0_i32_0 = arith.constant 0 : i32
    return %arg0, %c0_i32 : i32, i32
  }
}

</mosaic_0001>

<llo_original>
// kernel: edge_block_pallas.1
$region0: #{edge_block_pallas.1}
  #allocation0 [shape = 'u32[]', space=smem, size = 0x4, offset = 0x4, fixed_abs, tag = 'smem constant byte address 0x4 - core index']
  #allocation1 [shape = 'u32[144,128]{1,0:T(1,128)}', space=vmem, size = 0x12000, scoped, tag = 'internal scratch']
  %s0 = inlined_call_operand.vmem [shape: f32[64,32], index: 0, kind: input, shape index: {}]
  %s1 = inlined_call_operand.vmem [shape: f32[64,128], index: 1, kind: input, shape index: {}]
  %s2 = inlined_call_operand.vmem [shape: f32[32,128], index: 2, kind: input, shape index: {}]
  %s3 = inlined_call_operand.vmem [shape: f32[64,128], index: 3, kind: output, shape index: {}]
  %s4 = sld [smem:[#allocation0]]
  $region45: #{edge_block_pallas.1} parent=0
    _
  %s6 = ssub.s32 1, %s4
  %s7 = scalar_select 0, %s6, %s4
  loop: start=0, step=1, limit=4
  $region2: #{edge_block_pallas.1} parent=0 // loop_pre_header
    _
  $region3: #{edge_block_pallas.1} parent=0 // loop_header
    %s9 = sphi 0, %s13
    %p10 = scmp.ge.s32.totalorder %s9, 4
    %s19 = sphi 0, %s21
    %s22 = sphi 0, %s19
    %s23 = sphi 0, %s22
    %s39 = sphi 0, %s23
    %s45 = sphi 0, %s47
    %s48 = sphi 0, %s45
    %s49 = sphi 0, %s48
    %s65 = sphi 0, %s49
    %s69 = sphi 0, %s69
    %s71 = sphi 0, %s69
    %s72 = sphi 0, %s71
    %s86 = sphi 0, %s72
    %s92 = sphi 0, %s94
    %s95 = sphi 0, %s92
    %s96 = sphi 0, %s95
    %s112 = sphi 0, %s96
  $region4: #{edge_block_pallas.1} parent=0 // loop_header_branch
    %12 = sbr.rel (%p10) target = $region8
  $region5: #{edge_block_pallas.1} parent=0 // loop_body
    %s14 = ssub.s32 %s9, 1
    %s15 = ssub.s32 %s9, 2
    %s16 = sadd.s32 %s9, 1
    %s17 = ssub.s32 %s9, %s16
    %p18 = scmp.eq.s32.totalorder %s17, 0
    %s20 = sadd.s32 %s19, 1
    %s21 = scalar_select %p18, %s19, %s20
    %p24 = pneg %p18
    %p25 = scmp.eq.s32.totalorder %s9, 1
    %p26 = por %p24, %p25
    %p27 = scmp.ne.s32.totalorder %s19, %s22
    %p28 = scmp.eq.s32.totalorder %s9, 0
    %p29 = por %p27, %p28
    %p30 = scmp.ne.s32.totalorder %s19, %s22
    %p31 = scmp.eq.s32.totalorder %s14, 1
    %p32 = por %p30, %p31
    %p33 = scmp.ne.s32.totalorder %s22, %s23
    %p34 = scmp.eq.s32.totalorder %s14, 0
    %p35 = por %p33, %p34
    %p36 = scmp.ne.s32.totalorder %s22, %s23
    %p37 = scmp.eq.s32.totalorder %s15, 1
    %p38 = por %p36, %p37
    %p40 = scmp.ne.s32.totalorder %s23, %s39
    %p41 = scmp.eq.s32.totalorder %s15, 0
    %p42 = por %p40, %p41
    %s43 = ssub.s32 %s9, %s16
    %p44 = scmp.eq.s32.totalorder %s43, 0
    %s46 = sadd.s32 %s45, 1
    %s47 = scalar_select %p44, %s45, %s46
    %p50 = pneg %p44
    %p51 = scmp.eq.s32.totalorder %s9, 1
    %p52 = por %p50, %p51
    %p53 = scmp.ne.s32.totalorder %s45, %s48
    %p54 = scmp.eq.s32.totalorder %s9, 0
    %p55 = por %p53, %p54
    %p56 = scmp.ne.s32.totalorder %s45, %s48
    %p57 = scmp.eq.s32.totalorder %s14, 1
    %p58 = por %p56, %p57
    %p59 = scmp.ne.s32.totalorder %s48, %s49
    %p60 = scmp.eq.s32.totalorder %s14, 0
    %p61 = por %p59, %p60
    %p62 = scmp.ne.s32.totalorder %s48, %s49
    %p63 = scmp.eq.s32.totalorder %s15, 1
    %p64 = por %p62, %p63
    %p66 = scmp.ne.s32.totalorder %s49, %s65
    %p67 = scmp.eq.s32.totalorder %s15, 0
    %p68 = por %p66, %p67
    %s70 = sadd.s32 %s69, 1
    %p73 = scmp.eq.s32.totalorder %s9, 1
    %p74 = scmp.ne.s32.totalorder %s69, %s71
    %p75 = scmp.eq.s32.totalorder %s9, 0
    %p76 = por %p74, %p75
    %p77 = scmp.ne.s32.totalorder %s69, %s71
    %p78 = scmp.eq.s32.totalorder %s14, 1
    %p79 = por %p77, %p78
    %p80 = scmp.ne.s32.totalorder %s71, %s72
    %p81 = scmp.eq.s32.totalorder %s14, 0
    %p82 = por %p80, %p81
    %p83 = scmp.ne.s32.totalorder %s71, %s72
    %p84 = scmp.eq.s32.totalorder %s15, 1
    %p85 = por %p83, %p84
    %p87 = scmp.ne.s32.totalorder %s72, %s86
    %p88 = scmp.eq.s32.totalorder %s15, 0
    %p89 = por %p87, %p88
    %s90 = ssub.s32 %s9, %s16
    %p91 = scmp.eq.s32.totalorder %s90, 0
    %s93 = sadd.s32 %s92, 1
    %s94 = scalar_select %p91, %s92, %s93
    %p97 = pneg %p91
    %p98 = scmp.eq.s32.totalorder %s9, 1
    %p99 = por %p97, %p98
    %p100 = scmp.ne.s32.totalorder %s92, %s95
    %p101 = scmp.eq.s32.totalorder %s9, 0
    %p102 = por %p100, %p101
    %p103 = scmp.ne.s32.totalorder %s92, %s95
    %p104 = scmp.eq.s32.totalorder %s14, 1
    %p105 = por %p103, %p104
    %p106 = scmp.ne.s32.totalorder %s95, %s96
    %p107 = scmp.eq.s32.totalorder %s14, 0
    %p108 = por %p106, %p107
    %p109 = scmp.ne.s32.totalorder %s95, %s96
    %p110 = scmp.eq.s32.totalorder %s15, 1
    %p111 = por %p109, %p110
    %p113 = scmp.ne.s32.totalorder %s96, %s112
    %p114 = scmp.eq.s32.totalorder %s15, 0
    %p115 = por %p113, %p114
    %p116 = scmp.le.s32.totalorder 1, %s9
    %p117 = scmp.lt.s32.totalorder %s9, 3
    %p118 = pnand %p116, %p117
    %p119 = pneg %p118
    // Predicated region
    $region9: #{edge_block_pallas.1} parent=5 // pred_check
      _
    $region10: #{edge_block_pallas.1} parent=5 // pred_check_branch
      %121 = sbr.rel (%p118) target = $region12
    $region11: #{edge_block_pallas.1} parent=5 // pred_region
      %s122 = ssub.s32 %s9, 1
      // Predicated region
      $region13: #{edge_block_pallas.1} parent=11 // pred_check
        %p123 = pneg %p82
      $region14: #{edge_block_pallas.1} parent=11 // pred_check_branch
        %125 = sbr.rel (%p123) target = $region16
      $region15: #{edge_block_pallas.1} parent=11 // pred_region
        _
      $region16: #{edge_block_pallas.1} parent=11 // pred_fallthru
        _
    $region12: #{edge_block_pallas.1} parent=5 // pred_fallthru
      _
    %p126 = scmp.lt.s32.totalorder %s9, 2
    // Predicated region
    $region17: #{edge_block_pallas.1} parent=5 // pred_check
      %p127 = pneg %p126
    $region18: #{edge_block_pallas.1} parent=5 // pred_check_branch
      %129 = sbr.rel (%p127) target = $region20
    $region19: #{edge_block_pallas.1} parent=5 // pred_region
      // Predicated region
      $region21: #{edge_block_pallas.1} parent=19 // pred_check
        %p130 = pneg %p29
      $region22: #{edge_block_pallas.1} parent=19 // pred_check_branch
        %132 = sbr.rel (%p130) target = $region24
      $region23: #{edge_block_pallas.1} parent=19 // pred_region
        %s133 = smul.u32 4, %s9
        %p134 = scmp.lt.s32.totalorder %s133, 7
        %s135 = scalar_select %p134, %s133, 7
        %s136 = smul.addr %s135, 8
        %s137 = scalar_lea.vmem %s0, %s136
        %s138 = smul.u32 4, %s9
      $region24: #{edge_block_pallas.1} parent=19 // pred_fallthru
        _
      // Predicated region
      $region25: #{edge_block_pallas.1} parent=19 // pred_check
        %p139 = pneg %p55
      $region26: #{edge_block_pallas.1} parent=19 // pred_check_branch
        %141 = sbr.rel (%p139) target = $region28
      $region27: #{edge_block_pallas.1} parent=19 // pred_region
        %s142 = smul.u32 4, %s9
        %p143 = scmp.lt.s32.totalorder %s142, 7
        %s144 = scalar_select %p143, %s142, 7
        %s145 = smul.addr %s144, 8
        %s146 = scalar_lea.vmem %s1, %s145
        %s147 = smul.u32 4, %s9
      $region28: #{edge_block_pallas.1} parent=19 // pred_fallthru
        _
    $region20: #{edge_block_pallas.1} parent=5 // pred_fallthru
      _
    %p148 = scmp.le.s32.totalorder 1, %s9
    %p149 = scmp.lt.s32.totalorder %s9, 3
    %p150 = pnand %p148, %p149
    %p151 = pneg %p150
    // Predicated region
    $region29: #{edge_block_pallas.1} parent=5 // pred_check
      _
    $region30: #{edge_block_pallas.1} parent=5 // pred_check_branch
      %153 = sbr.rel (%p150) target = $region32
    $region31: #{edge_block_pallas.1} parent=5 // pred_region
      %s154 = ssub.s32 %s9, 1
      %s155 = smul.u32 4, %s14
      %p156 = scmp.lt.s32.totalorder %s155, 7
      %s157 = scalar_select %p156, %s155, 7
      %s158 = smul.addr %s157, 8
      %s159 = scalar_lea.vmem %s0, %s158
      %p160 = pneg %p35
      %p161 = pneg %p32
      %s162 = smul.u32 4, %s14
      %p163 = scmp.lt.s32.totalorder %s162, 7
      %s164 = scalar_select %p163, %s162, 7
      %s165 = smul.addr %s164, 8
      %s166 = scalar_lea.vmem %s1, %s165
      %p167 = pneg %p61
      %p168 = pneg %p58
      %p169 = pneg %p82
      %p170 = pneg %p79
      %p171 = pneg %p108
      %p172 = pneg %p105
      %s173 = smul.u32 4, %s14
      %p174 = scmp.lt.s32.totalorder %s173, 7
      %s175 = scalar_select %p174, %s173, 7
      %s176 = smul.addr %s175, 8
      %s177 = scalar_lea.vmem %s3, %s176
      %s178 = smul.u32 4, %s14
      %p179 = scmp.lt.s32.totalorder %s178, 7
      %s180 = scalar_select %p179, %s178, 7
      %s181 = smul.addr %s180, 8
      %s182 = scalar_lea.vmem %s0, %s181
      %s183 = smul.u32 4, %s14
      %s184 = smul.u32 4, %s14
      %p185 = scmp.lt.s32.totalorder %s184, 7
      %s186 = scalar_select %p185, %s184, 7
      %s187 = smul.addr %s186, 8
      %s188 = scalar_lea.vmem %s1, %s187
      %s189 = smul.u32 4, %s14
      %s190 = smul.u32 4, %s14
      %p191 = scmp.lt.s32.totalorder %s190, 7
      %s192 = scalar_select %p191, %s190, 7
      %s193 = smul.addr %s192, 8
      %s194 = scalar_lea.vmem %s3, %s193
      %s195 = smul.u32 4, %s14
      %v196 = vld [vmem:[%s182] sm:$0xff]
      %v197 = vld [vmem:[%s182 + $0x8] sm:$0xff]
      %v198 = vld [vmem:[%s182 + $0x10] sm:$0xff]
      %v199 = vld [vmem:[%s182 + $0x18] sm:$0xff]
      %v200 = vld [vmem:[%s2] sm:$0xff]
      %v201 = vld [vmem:[%s2 + $0x8] sm:$0xff]
      %v202 = vld [vmem:[%s2 + $0x10] sm:$0xff]
      %v203 = vld [vmem:[%s2 + $0x18] sm:$0xff]
      %v204 = vld [vmem:[%s188] sm:$0xff]
      %v205 = vld [vmem:[%s188 + $0x8] sm:$0xff]
      %v206 = vld [vmem:[%s188 + $0x10] sm:$0xff]
      %v207 = vld [vmem:[%s188 + $0x18] sm:$0xff]
      %vm208 = vcmask 261120
      %v210 = vsel %vm208, %v196, 0
      %v213 = vsel %vm208, %v197, 0
      %v216 = vsel %vm208, %v198, 0
      %v219 = vsel %vm208, %v199, 0
      %221 = vmatprep.subr.mxu0 0.0
      %222 = vmatpush1.msra.mxu0 0.0
      %223 = vmatprep.subr.mxu0 0.0
      %224 = vmatpush1.msra.mxu0 0.0
      %225 = vmatprep.subr.mxu0 0.0
      %226 = vmatpush1.msra.mxu0 0.0
      %227 = vmatprep.subr.mxu0 0.0
      %228 = vmatpush1.msra.mxu0 0.0
      %229 = vmatprep.subr.mxu0 0.0
      %230 = vmatpush1.msra.mxu0 0.0
      %231 = vmatprep.subr.mxu0 0.0
      %232 = vmatpush1.msra.mxu0 0.0
      %233 = vmatprep.subr.mxu0 0.0
      %234 = vmatpush1.msra.mxu0 0.0
      %235 = vmatprep.subr.mxu0 0.0
      %236 = vmatpush1.msra.mxu0 0.0
      %237 = vmatprep.subr.mxu0 0.0
      %238 = vmatpush1.msra.mxu0 0.0
      %239 = vmatprep.subr.mxu0 0.0
      %240 = vmatpush1.msra.mxu0 0.0
      %241 = vmatprep.subr.mxu0 0.0
      %242 = vmatpush1.msra.mxu0 0.0
      %243 = vmatprep.subr.mxu0 0.0
      %244 = vmatpush1.msra.mxu0 0.0
      %245 = vmatprep.subr.mxu0 0.0
      %246 = vmatpush1.msra.mxu0 %v203
      %247 = vmatprep.subr.mxu0 0.0
      %248 = vmatpush1.msra.mxu0 %v202
      %249 = vmatprep.subr.mxu0 0.0
      %250 = vmatpush1.msra.mxu0 %v201
      %251 = vmatprep.subr.mxu0 0.0
      %252 = vmatpush1.msra.mxu0 %v200
      %253 = vmatprep.subr.mxu0 0.0
      %254 = vmatpush2.msra.mxu0 0.0
      %255 = vmatprep.subr.mxu0 0.0
      %256 = vmatpush2.msra.mxu0 0.0
      %257 = vmatprep.subr.mxu0 0.0
      %258 = vmatpush2.msra.mxu0 0.0
      %259 = vmatprep.subr.mxu0 0.0
      %260 = vmatpush2.msra.mxu0 0.0
      %261 = vmatprep.subr.mxu0 0.0
      %262 = vmatpush2.msra.mxu0 0.0
      %263 = vmatprep.subr.mxu0 0.0
      %264 = vmatpush2.msra.mxu0 0.0
      %265 = vmatprep.subr.mxu0 0.0
      %266 = vmatpush2.msra.mxu0 0.0
      %267 = vmatprep.subr.mxu0 0.0
      %268 = vmatpush2.msra.mxu0 0.0
      %269 = vmatprep.subr.mxu0 0.0
      %270 = vmatpush2.msra.mxu0 0.0
      %271 = vmatprep.subr.mxu0 0.0
      %272 = vmatpush2.msra.mxu0 0.0
      %273 = vmatprep.subr.mxu0 0.0
      %274 = vmatpush2.msra.mxu0 0.0
      %275 = vmatprep.subr.mxu0 0.0
      %276 = vmatpush2.msra.mxu0 0.0
      %277 = vmatprep.subr.mxu0 0.0
      %278 = vmatpush2.msra.mxu0 0.0
      %279 = vmatprep.subr.mxu0 0.0
      %280 = vmatpush2.msra.mxu0 0.0
      %281 = vmatprep.subr.mxu0 0.0
      %282 = vmatpush2.msra.mxu0 0.0
      %283 = vmatprep.subr.mxu0 0.0
      %284 = vmatpush2.msra.mxu0 0.0
      %285 = vmatprep.mubr.f32.mxu0 0.0
      %286 = vmatmul.mubr.f32.gmra.mxu0 %v210
      %v287 = vpop.f32.mrf.mxu0
      %v288 = vadd.f32 %v204, %v287
      %v289 = vpop.f32.mrf.mxu0
      %290 = vmatprep.mubr.f32.mxu0 0.0
      %291 = vmatmul.mubr.f32.gmra.mxu0 %v213
      %v292 = vpop.f32.mrf.mxu0
      %v293 = vadd.f32 %v205, %v292
      %v294 = vpop.f32.mrf.mxu0
      %295 = vmatprep.mubr.f32.mxu0 0.0
      %296 = vmatmul.mubr.f32.gmra.mxu0 %v216
      %v297 = vpop.f32.mrf.mxu0
      %v298 = vadd.f32 %v206, %v297
      %v299 = vpop.f32.mrf.mxu0
      %300 = vmatprep.mubr.f32.mxu0 0.0
      %301 = vmatmul.mubr.f32.gmra.mxu0 %v219
      %v302 = vpop.f32.mrf.mxu0
      %v303 = vadd.f32 %v207, %v302
      %v304 = vpop.f32.mrf.mxu0
      %305 = vdwg.mxu0
      %306 = vst [vmem:[%s194] sm:$0xff] %v288
      %307 = vst [vmem:[%s194 + $0x8] sm:$0xff] %v293
      %308 = vst [vmem:[%s194 + $0x10] sm:$0xff] %v298
      %309 = vst [vmem:[%s194 + $0x18] sm:$0xff] %v303
      %s310 = smul.u32 4, %s14
      %p311 = scmp.lt.s32.totalorder %s310, 7
      %s312 = scalar_select %p311, %s310, 7
      %s313 = smul.addr %s312, 8
      %s314 = scalar_lea.vmem %s3, %s313
      // Predicated region
      $region33: #{edge_block_pallas.1} parent=31 // pred_check
        %p315 = pneg %p105
      $region34: #{edge_block_pallas.1} parent=31 // pred_check_branch
        %317 = sbr.rel (%p315) target = $region36
      $region35: #{edge_block_pallas.1} parent=31 // pred_region
        %s318 = smul.u32 4, %s14
      $region36: #{edge_block_pallas.1} parent=31 // pred_fallthru
        _
    $region32: #{edge_block_pallas.1} parent=5 // pred_fallthru
      _
    %p319 = scmp.le.s32.totalorder 2, %s9
    // Predicated region
    $region37: #{edge_block_pallas.1} parent=5 // pred_check
      %p320 = pneg %p319
    $region38: #{edge_block_pallas.1} parent=5 // pred_check_branch
      %322 = sbr.rel (%p320) target = $region40
    $region39: #{edge_block_pallas.1} parent=5 // pred_region
      %s323 = ssub.s32 %s9, 2
      // Predicated region
      $region41: #{edge_block_pallas.1} parent=39 // pred_check
        %p324 = pneg %p111
      $region42: #{edge_block_pallas.1} parent=39 // pred_check_branch
        %326 = sbr.rel (%p324) target = $region44
      $region43: #{edge_block_pallas.1} parent=39 // pred_region
        %s327 = smul.u32 4, %s15
        %p328 = scmp.lt.s32.totalorder %s327, 7
        %s329 = scalar_select %p328, %s327, 7
        %s330 = smul.addr %s329, 8
        %s331 = scalar_lea.vmem %s3, %s330
      $region44: #{edge_block_pallas.1} parent=39 // pred_fallthru
        _
    $region40: #{edge_block_pallas.1} parent=5 // pred_fallthru
      _
  $region6: #{edge_block_pallas.1} parent=0 // loop_footer
    %s13 = sadd.s32 1, %s9
  $region7: #{edge_block_pallas.1} parent=0 // loop_footer_branch
    %8 = sbr.rel target = $region3
  $region8: #{edge_block_pallas.1} parent=0 // loop_exit
    _

</llo_original>
